<compile_context>
chip_gen: v5e
topology: v5e:2x2
jax: 0.10.0
libtpu: 0.0.40
codegen_flags: <defaults>
</compile_context>

<pallas_src>
import jax
import jax.numpy as jnp
from jax import lax
from jax.experimental import pallas as pl
from jax.experimental.pallas import tpu as pltpu


# Conservative budget for the pipelined VMEM working set (double-buffered
# x / out blocks + weight allocation). 24 MiB fits under the 32 MiB scoped
# limit requested below on every generation (v5e/v6e: 128 MiB physical,
# v7x: 64 MiB physical per TensorCore).
_VMEM_WORKSET_BUDGET = 24 * 1024 * 1024
_VMEM_LIMIT_BYTES = 32 * 1024 * 1024

# Below this many MACs a Pallas launch is pure overhead; let XLA fuse a dot.
_TINY_MAC_THRESHOLD = 1 << 21


def _round_up(a, m):
    return ((a + m - 1) // m) * m


def _sublane(itemsize):
    # Minimum second-to-last-dim tile multiple per dtype packing.
    if itemsize >= 4:
        return 8
    if itemsize == 2:
        return 16
    return 32


# ---------------------------------------------------------------------------
# Kernels
# ---------------------------------------------------------------------------
def _resident_kernel(x_ref, w_ref, o_ref):
    """One (tm, N_pad) output tile; the full (N_pad, K) weight is VMEM-resident."""
    o_ref[...] = lax.dot_general(
        x_ref[...],
        w_ref[...],
        dimension_numbers=(((1,), (1,)), ((), ())),  # x @ w.T, no transpose op
        preferred_element_type=jnp.float32,
    ).astype(o_ref.dtype)


def _tiled_kernel(x_ref, w_ref, o_ref, acc_ref):
    """(tm, tn) output tile; grid axis 2 loops over K chunks (fallback path)."""
    @pl.when(pl.program_id(2) == 0)
    def _():
        acc_ref[...] = jnp.zeros_like(acc_ref)

    acc_ref[...] += lax.dot_general(
        x_ref[...],
        w_ref[...],
        dimension_numbers=(((1,), (1,)), ((), ())),
        preferred_element_type=jnp.float32,
    )

    @pl.when(pl.program_id(2) == pl.num_programs(2) - 1)
    def _():
        o_ref[...] = acc_ref[...].astype(o_ref.dtype)


# ---------------------------------------------------------------------------
# Jitted wrappers
# ---------------------------------------------------------------------------
@jax.jit
def _adapter_linear_xla(x, weight):
    # Tiny-problem fast path: a plain dot XLA can fuse with its neighbors.
    return jnp.einsum("...k,nk->...n", x, weight.astype(x.dtype))


@jax.jit
def _adapter_linear_pallas(x, weight):
    """y[..., n] = sum_k x[..., k] * weight[n, k] via Pallas tiled matmul."""
    lead = x.shape[:-1]
    K = x.shape[-1]
    N = weight.shape[0]
    M = 1
    for d in lead:
        M *= d

    out_dtype = x.dtype
    if weight.dtype != x.dtype:
        weight = weight.astype(x.dtype)          # MXU wants matching operand dtypes
    in_isz = jnp.dtype(x.dtype).itemsize
    out_isz = jnp.dtype(out_dtype).itemsize
    sub = _sublane(in_isz)

    x2 = x.reshape(M, K)

    # Lane-dense output: pad N up to a multiple of 128 (avoids masked vst).
    n_pad = _round_up(N, 128)

    cost = pl.CostEstimate(
        flops=2 * M * N * K,
        transcendentals=0,
        bytes_accessed=(M * K + N * K) * in_isz + M * N * out_isz,
    )

    def resident_workset(tm):
        return (2 * tm * K * in_isz          # x double buffer
                + 2 * n_pad * K * in_isz     # resident weight (dbl-buffered alloc)
                + 2 * tm * n_pad * out_isz)  # out double buffer

    if resident_workset(sub) <= _VMEM_WORKSET_BUDGET:
        # ---------------- weight-resident path (typical adapter) ----------
        # Largest power-of-two-ish M tile that fits the VMEM budget.
        fit = sub
        for cand in (1024, 512, 256, 128, 64, 32, 16, 8):
            if cand < sub:
                continue
            if resident_workset(cand) <= _VMEM_WORKSET_BUDGET:
                fit = cand
                break
        # Never pad M beyond one sublane-rounded tile.
        fit = min(fit, _round_up(M, sub))
        # Prefer a large tile that divides M exactly so x needs no pad copy.
        tm = fit
        for cand in (1024, 768, 512, 384, 256, 128):
            if cand <= fit and M % cand == 0:
                tm = cand
                break
        m_pad = _round_up(M, tm)

        x_p = x2 if m_pad == M else jnp.pad(x2, ((0, m_pad - M), (0, 0)))
        w_p = weight if n_pad == N else jnp.pad(weight, ((0, n_pad - N), (0, 0)))

        out = pl.pallas_call(
            _resident_kernel,
            out_shape=jax.ShapeDtypeStruct((m_pad, n_pad), out_dtype),
            grid_spec=pltpu.PrefetchScalarGridSpec(
                num_scalar_prefetch=0,
                grid=(m_pad // tm,),
                in_specs=[
                    pl.BlockSpec((tm, K), lambda i: (i, 0)),
                    # Constant index_map: weight is DMA'd once and stays
                    # resident across the whole grid.
                    pl.BlockSpec((n_pad, K), lambda i: (0, 0)),
                ],
                out_specs=pl.BlockSpec((tm, n_pad), lambda i: (i, 0)),
            ),
            compiler_params=pltpu.CompilerParams(
                dimension_semantics=("parallel",),
                vmem_limit_bytes=_VMEM_LIMIT_BYTES,
            ),
            cost_estimate=cost,
        )(x_p, w_p)
    else:
        # ------------- tiled fallback: weight too big to be resident -------
        tm = min(512, _round_up(M, sub))
        tn = min(256, _round_up(N, 128))
        tk = min(512, _round_up(K, 128))
        m_pad = _round_up(M, tm)
        n_pad = _round_up(N, tn)
        k_pad = _round_up(K, tk)

        x_p = x2 if (m_pad == M and k_pad == K) else jnp.pad(
            x2, ((0, m_pad - M), (0, k_pad - K)))
        w_p = weight if (n_pad == N and k_pad == K) else jnp.pad(
            weight, ((0, n_pad - N), (0, k_pad - K)))

        out = pl.pallas_call(
            _tiled_kernel,
            out_shape=jax.ShapeDtypeStruct((m_pad, n_pad), out_dtype),
            grid_spec=pltpu.PrefetchScalarGridSpec(
                num_scalar_prefetch=0,
                grid=(m_pad // tm, n_pad // tn, k_pad // tk),
                in_specs=[
                    pl.BlockSpec((tm, tk), lambda i, j, k: (i, k)),
                    pl.BlockSpec((tn, tk), lambda i, j, k: (j, k)),
                ],
                out_specs=pl.BlockSpec((tm, tn), lambda i, j, k: (i, j)),
                scratch_shapes=[pltpu.VMEM((tm, tn), jnp.float32)],
            ),
            compiler_params=pltpu.CompilerParams(
                dimension_semantics=("parallel", "parallel", "arbitrary"),
                vmem_limit_bytes=_VMEM_LIMIT_BYTES,
            ),
            cost_estimate=cost,
        )(x_p, w_p)

    return out[:M, :N].reshape(lead + (N,))


# ---------------------------------------------------------------------------
# Public forward + init
# ---------------------------------------------------------------------------
def adapter_forward(x, weight=None, *, force_pallas=False):
    """Adapter.forward.

    weight: None                -> Identity (x_in == x_out)
            (x_out, x_in) array -> Linear(bias=False): y = x @ weight.T
    """
    if weight is None:
        # Identity branch: pure pass-through (no compute to put in a kernel).
        return x

    x_out, x_in = weight.shape
    assert x.shape[-1] == x_in

    M = 1
    for d in x.shape[:-1]:
        M *= d

    if not force_pallas and M * x_in * x_out < _TINY_MAC_THRESHOLD:
        # A Pallas launch is pure overhead at this size; let XLA fuse the dot.
        return _adapter_linear_xla(x, weight)

    return _adapter_linear_pallas(x, weight)


def init_adapter_params(key, x_in, x_out, dtype=jnp.float32):
    """Deterministic init matching nn.Linear default (Kaiming-uniform-ish)."""
    if x_in == x_out:
        return None  # Identity
    bound = 1.0 / (x_in ** 0.5)
    return jax.random.uniform(key, (x_out, x_in), dtype=dtype,
                              minval=-bound, maxval=bound)


if __name__ == "__main__":
    key = jax.random.PRNGKey(0)
    k_w, k_x, k_w2, k_x2, k_w3, k_x3 = jax.random.split(key, 6)

    # --- small shapes consistent with the module: x = (batch, seq, x_in) ----
    B, S, X_IN, X_OUT = 2, 8, 32, 64
    x = jax.random.normal(k_x, (B, S, X_IN), dtype=jnp.float32)
    w = init_adapter_params(k_w, X_IN, X_OUT)

    # Force the Pallas path even at toy size so the kernel itself is exercised.
    y = jax.block_until_ready(adapter_forward(x, w, force_pallas=True))
    y_ref = jnp.einsum("bsk,nk->bsn", x, w)
    assert y.shape == (B, S, X_OUT)
    assert jnp.allclose(y, y_ref, atol=1e-5, rtol=1e-5)

    # --- bigger ragged case that takes the Pallas path naturally ------------
    # (exercises lane-padding N 72->128 and the weight-resident big-M tiling)
    B2, S2, X_IN2, X_OUT2 = 2, 256, 96, 72
    x_big = jax.random.normal(k_x2, (B2, S2, X_IN2), dtype=jnp.float32)
    w_big = init_adapter_params(k_w2, X_IN2, X_OUT2)
    y_big = jax.block_until_ready(adapter_forward(x_big, w_big))
    y_big_ref = jnp.einsum("bsk,nk->bsn", x_big, w_big)
    assert y_big.shape == (B2, S2, X_OUT2)
    assert jnp.allclose(y_big, y_big_ref, atol=1e-4, rtol=1e-4)

    # --- bf16 case (exercises dtype-dependent sublane / packing) ------------
    x_bf = jax.random.normal(k_x3, (2, 128, 64), dtype=jnp.bfloat16)
    w_bf = init_adapter_params(k_w3, 64, 48, dtype=jnp.bfloat16)
    y_bf = jax.block_until_ready(adapter_forward(x_bf, w_bf, force_pallas=True))
    y_bf_ref = jnp.einsum("bsk,nk->bsn",
                          x_bf.astype(jnp.float32),
                          w_bf.astype(jnp.float32)).astype(jnp.bfloat16)
    assert y_bf.shape == (2, 128, 48)
    assert jnp.allclose(y_bf.astype(jnp.float32), y_bf_ref.astype(jnp.float32),
                        atol=2e-2, rtol=2e-2)

    # --- identity path (x_in == x_out): pass-through -----------------------
    w_id = init_adapter_params(k_w, X_IN, X_IN)
    y_id = jax.block_until_ready(adapter_forward(x, w_id))
    assert y_id.shape == x.shape
    assert jnp.allclose(y_id, x)

    print("KERNEL_OK")
</pallas_src>

<mosaic_0001>
module attributes {stable_mosaic.version = 11 : i64} {
  func.func @_resident_kernel(%arg0: i32, %arg1: memref<16x32xf32, #tpu.memory_space<vmem>>, %arg2: memref<128x32xf32, #tpu.memory_space<vmem>>, %arg3: memref<16x128xf32, #tpu.memory_space<vmem>>) attributes {dimension_semantics = [#tpu.dimension_semantics<parallel>], iteration_bounds = array<i64: 1>, scalar_prefetch = 0 : i64, scratch_operands = 0 : i64, tpu.core_type = #tpu.core_type<tc>, window_params = [{transform_indices = @transform_0, window_bounds = array<i64: 16, 32>}, {pipeline_mode = #tpu.pipeline_mode<synchronous>, transform_indices = @transform_1, window_bounds = array<i64: 128, 32>}, {transform_indices = @transform_2, window_bounds = array<i64: 16, 128>}]} {
    %c0 = arith.constant 0 : index
    %c0_0 = arith.constant 0 : index
    %0 = vector.load %arg1[%c0, %c0_0] : memref<16x32xf32, #tpu.memory_space<vmem>>, vector<16x32xf32>
    %c0_1 = arith.constant 0 : index
    %c0_2 = arith.constant 0 : index
    %1 = vector.load %arg2[%c0_1, %c0_2] : memref<128x32xf32, #tpu.memory_space<vmem>>, vector<128x32xf32>
    %cst = arith.constant dense<0.000000e+00> : vector<16x128xf32>
    %2 = tpu.matmul %0, %1, %cst {dimension_numbers = #tpu.dot_dimension_numbers<[1], [1], [0], [0], [0, 0, 1, 0], [], []>} : vector<16x32xf32>, vector<128x32xf32>, vector<16x128xf32> -> vector<16x128xf32>
    %c0_3 = arith.constant 0 : index
    %c0_4 = arith.constant 0 : index
    %3 = vector.load %arg3[%c0_3, %c0_4] : memref<16x128xf32, #tpu.memory_space<vmem>>, vector<16x128xf32>
    tpu.vector_store %arg3[%c0_3, %c0_4], %2 {strides = array<i32>} : memref<16x128xf32, #tpu.memory_space<vmem>>, vector<16x128xf32>,
    return
  }
  func.func @transform_0(%arg0: i32) -> (i32, i32) {
    %c0_i32 = arith.constant 0 : i32
    %c0_i32_0 = arith.constant 0 : i32
    return %arg0, %c0_i32 : i32, i32
  }
  func.func @transform_1(%arg0: i32) -> (i32, i32) {
    %c0_i32 = arith.constant 0 : i32
    %c0_i32_0 = arith.constant 0 : i32
    %c0_i32_1 = arith.constant 0 : i32
    return %c0_i32, %c0_i32_0 : i32, i32
  }
  func.func @transform_2(%arg0: i32) -> (i32, i32) {
    %c0_i32 = arith.constant 0 : i32
    %c0_i32_0 = arith.constant 0 : i32
    return %arg0, %c0_i32 : i32, i32
  }
}

</mosaic_0001>

<llo_original>
// kernel: _adapter_linear_pallas.1
$region0: #{_adapter_linear_pallas.1}
  #allocation0 [shape = 'u32[]', space=smem, size = 0x4, offset = 0x4, fixed_abs, tag = 'smem constant byte address 0x4 - core index']
  #allocation1 [shape = 'u32[72,128]{1,0:T(1,128)}', space=vmem, size = 0x9000, scoped, tag = 'internal scratch']
  %s0 = inlined_call_operand.vmem [shape: f32[16,32], index: 0, kind: input, shape index: {}]
  %s1 = inlined_call_operand.vmem [shape: f32[128,32], index: 1, kind: input, shape index: {}]
  %s2 = inlined_call_operand.vmem [shape: f32[16,128], index: 2, kind: output, shape index: {}]
  %s3 = sld [smem:[#allocation0]]
  $region18: #{_adapter_linear_pallas.1} parent=0
    _
  %s5 = ssub.s32 1, %s3
  %s6 = scalar_select 0, %s5, %s3
  // Predicated region
  $region2: #{_adapter_linear_pallas.1} parent=0 // pred_check
    _
  $region3: #{_adapter_linear_pallas.1} parent=0 // pred_check_branch
    %8 = sbr.rel (0) target = $region5
  $region4: #{_adapter_linear_pallas.1} parent=0 // pred_region
    _
  $region5: #{_adapter_linear_pallas.1} parent=0 // pred_fallthru
    _
  // Predicated region
  $region6: #{_adapter_linear_pallas.1} parent=0 // pred_check
    _
  $region7: #{_adapter_linear_pallas.1} parent=0 // pred_check_branch
    %10 = sbr.rel (0) target = $region9
  $region8: #{_adapter_linear_pallas.1} parent=0 // pred_region
    _
  $region9: #{_adapter_linear_pallas.1} parent=0 // pred_fallthru
    _
  %v11 = vld [vmem:[%s0] sm:$0xff]
  %v12 = vld [vmem:[%s0 + $0x8] sm:$0xff]
  %v13 = vld [vmem:[%s1] sm:$0xff]
  %v14 = vld [vmem:[%s1 + $0x8] sm:$0xff]
  %v15 = vld [vmem:[%s1 + $0x10] sm:$0xff]
  %v16 = vld [vmem:[%s1 + $0x18] sm:$0xff]
  %v17 = vld [vmem:[%s1 + $0x20] sm:$0xff]
  %v18 = vld [vmem:[%s1 + $0x28] sm:$0xff]
  %v19 = vld [vmem:[%s1 + $0x30] sm:$0xff]
  %v20 = vld [vmem:[%s1 + $0x38] sm:$0xff]
  %v21 = vld [vmem:[%s1 + $0x40] sm:$0xff]
  %v22 = vld [vmem:[%s1 + $0x48] sm:$0xff]
  %v23 = vld [vmem:[%s1 + $0x50] sm:$0xff]
  %v24 = vld [vmem:[%s1 + $0x58] sm:$0xff]
  %v25 = vld [vmem:[%s1 + $0x60] sm:$0xff]
  %v26 = vld [vmem:[%s1 + $0x68] sm:$0xff]
  %v27 = vld [vmem:[%s1 + $0x70] sm:$0xff]
  %v28 = vld [vmem:[%s1 + $0x78] sm:$0xff]
  %vm29 = vcmask 261120
  %v31 = vsel %vm29, %v11, 0
  %v34 = vsel %vm29, %v12, 0
  %v37 = vsel %vm29, %v13, 0
  %v40 = vsel %vm29, %v14, 0
  %v43 = vsel %vm29, %v15, 0
  %v46 = vsel %vm29, %v16, 0
  %v49 = vsel %vm29, %v17, 0
  %v52 = vsel %vm29, %v18, 0
  %v55 = vsel %vm29, %v19, 0
  %v58 = vsel %vm29, %v20, 0
  %v61 = vsel %vm29, %v21, 0
  %v64 = vsel %vm29, %v22, 0
  %v67 = vsel %vm29, %v23, 0
  %v70 = vsel %vm29, %v24, 0
  %v73 = vsel %vm29, %v25, 0
  %v76 = vsel %vm29, %v26, 0
  %v79 = vsel %vm29, %v27, 0
  %v82 = vsel %vm29, %v28, 0
  %84 = vmatpush.xpose.msra.mxu0 %v82
  %85 = vmatpush.xpose.msra.mxu0 %v79
  %86 = vmatpush.xpose.msra.mxu0 %v76
  %87 = vmatpush.xpose.msra.mxu0 %v73
  %88 = vmatpush.xpose.msra.mxu0 %v70
  %89 = vmatpush.xpose.msra.mxu0 %v67
  %90 = vmatpush.xpose.msra.mxu0 %v64
  %91 = vmatpush.xpose.msra.mxu0 %v61
  %92 = vmatpush.xpose.msra.mxu0 %v58
  %93 = vmatpush.xpose.msra.mxu0 %v55
  %94 = vmatpush.xpose.msra.mxu0 %v52
  %95 = vmatpush.xpose.msra.mxu0 %v49
  %96 = vmatpush.xpose.msra.mxu0 %v46
  %97 = vmatpush.xpose.msra.mxu0 %v43
  %98 = vmatpush.xpose.msra.mxu0 %v40
  %99 = vmatpush.xpose.msra.mxu0 %v37
  %100 = vmatmul.f32.gmra.mxu0 %v31
  %v101 = vpop.f32.mrf.mxu0
  %v102 = vadd.f32 0.0, %v101
  %103 = vmatmul.f32.gmra.mxu0 %v34
  %v104 = vpop.f32.mrf.mxu0
  %v105 = vadd.f32 0.0, %v104
  %106 = vdwg.mxu0
  %107 = vst [vmem:[%s2] sm:$0xff] %v102
  %108 = vst [vmem:[%s2 + $0x8] sm:$0xff] %v105
  // Predicated region
  $region10: #{_adapter_linear_pallas.1} parent=0 // pred_check
    _
  $region11: #{_adapter_linear_pallas.1} parent=0 // pred_check_branch
    %110 = sbr.rel (0) target = $region13
  $region12: #{_adapter_linear_pallas.1} parent=0 // pred_region
    _
  $region13: #{_adapter_linear_pallas.1} parent=0 // pred_fallthru
    _
  // Predicated region
  $region14: #{_adapter_linear_pallas.1} parent=0 // pred_check
    _
  $region15: #{_adapter_linear_pallas.1} parent=0 // pred_check_branch
    %112 = sbr.rel (0) target = $region17
  $region16: #{_adapter_linear_pallas.1} parent=0 // pred_region
    _
  $region17: #{_adapter_linear_pallas.1} parent=0 // pred_fallthru
    _

</llo_original>
